<compile_context>
chip_gen: v5e
topology: v5e:2x2
jax: 0.10.0
libtpu: 0.0.40
codegen_flags: <defaults>
</compile_context>

<pallas_src>
import functools

import jax
import jax.numpy as jnp
from jax.experimental import pallas as pl
from jax.experimental.pallas import tpu as pltpu


def _pick_q_block(n):
    """Query tile length: full sequence when small, else largest tile <= 256 dividing N."""
    if n <= 256:
        return n
    for tq in (256, 128, 64, 32, 16, 8):
        if n % tq == 0:
            return tq
    return n  # ragged N: fall back to a single query tile


def _vmem_limit_bytes():
    """Generation-aware scoped-VMEM limit (~75% of physical, clamped to [32, 100] MiB)."""
    cap = 64 * 1024 * 1024  # conservative fallback (v7x physical VMEM per TC)
    try:
        cap = int(getattr(pltpu.get_tpu_info(), "vmem_capacity_bytes", cap))
    except Exception:
        pass
    return max(32 * 1024 * 1024, min(int(cap * 3 // 4), 100 * 1024 * 1024))


# --------------------------------------------------------------------------
# Fused kernel. Grid = (batch, query tile).
#   x1, x2              : (N, C)            (batch dim squeezed by BlockSpec)
#   w_q,  b_q           : (C, C), (1, C)    softmax scale already folded in
#   w_kv, b_kv          : (C, 2C), (1, 2C)  K and V columns of the QKV weight
#   w_proj, b_proj      : (C, C), (1, C)
#   o_ref               : (q_block, C)
#   qs_ref              : VMEM scratch (N, C)   — projected (scaled) q, mxu dtype
#   kv_ref              : VMEM scratch (2N, 2C) — [k1;k2 | v1;v2],        mxu dtype
# --------------------------------------------------------------------------
def pwca_fused_kernel(x1_ref, x2_ref, wq_ref, bq_ref, wkv_ref, bkv_ref,
                      wproj_ref, bproj_ref, o_ref, qs_ref, kv_ref,
                      *, num_heads, q_block, mxu_dtype):
    N, C = x1_ref.shape
    H = num_heads
    D = C // H
    f32 = jnp.float32
    qi = pl.program_id(1)

    # Contract the LAST dim of both operands: feeds the MXU directly, no k transpose.
    dims = (((1,), (1,)), ((), ()))

    @pl.when(qi == 0)
    def _project():
        # QKV projection for the whole sequence, once per batch element.
        # x1 and x2 are stacked into one tall LHS for the K/V projection (fewer MXU
        # weight pushes); q2 is never needed so x2 never touches the q columns.
        x12 = jnp.concatenate([x1_ref[...], x2_ref[...]], axis=0).astype(mxu_dtype)   # (2N, C)
        kv = jnp.dot(x12, wkv_ref[...].astype(mxu_dtype),
                     preferred_element_type=f32) + bkv_ref[...]                       # (2N, 2C)
        kv_ref[...] = kv.astype(mxu_dtype)
        # Softmax scale is already folded into w_q / b_q (param-prep time).
        q = jnp.dot(x1_ref[...].astype(mxu_dtype), wq_ref[...].astype(mxu_dtype),
                    preferred_element_type=f32) + bq_ref[...]                         # (N, C)
        qs_ref[...] = q.astype(mxu_dtype)

    row0 = pl.multiple_of(qi * q_block, q_block)
    q_tile = qs_ref[pl.ds(row0, q_block), :]                                          # (TQ, C)

    head_outs = []
    for h in range(H):
        q = q_tile[:, h * D:(h + 1) * D]                       # (TQ, D)
        k = kv_ref[:, h * D:(h + 1) * D]                       # (2N, D)  [k1; k2]
        v = kv_ref[:, C + h * D:C + (h + 1) * D]               # (2N, D)  [v1; v2]

        # Single fused score block over both images' keys (joint softmax over 2N).
        s = jax.lax.dot_general(q, k, dims, preferred_element_type=f32)               # (TQ, 2N)
        m = jnp.max(s, axis=-1, keepdims=True)
        p = jnp.exp(s - m)                                                            # s dies here
        inv = pl.reciprocal(jnp.sum(p, axis=-1, keepdims=True), approx=True)          # EUP slot
        o_h = jnp.dot(p.astype(mxu_dtype), v, preferred_element_type=f32) * inv       # (TQ, D)
        head_outs.append(o_h.astype(mxu_dtype))

    # Lane-dense (TQ, C) slab assembled in registers (no VMEM scratch round trip),
    # then the output projection and one dense HBM store.
    attn_out = jnp.concatenate(head_outs, axis=-1)                                    # (TQ, C)
    out = jnp.dot(attn_out, wproj_ref[...].astype(mxu_dtype),
                  preferred_element_type=f32) + bproj_ref[...]
    o_ref[...] = out.astype(o_ref.dtype)


# --------------------------------------------------------------------------
# Full forward (mirrors PairWiseCrossAttention.forward, dropout = identity)
# --------------------------------------------------------------------------
def pwca_forward(x1, x2, params, num_heads, *, mxu_dtype=jnp.bfloat16,
                 q_block=None, out_dtype=jnp.float32):
    B, N, C = x1.shape
    assert C % num_heads == 0
    D = C // num_heads
    scale = float(D) ** (-0.5)

    if q_block is None:
        q_block = _pick_q_block(N)
    assert N % q_block == 0 and (q_block == N or q_block % 8 == 0), \
        "q_block must divide N and be a multiple of 8 (or equal N)"

    # Param prep: split QKV weight into q / kv parts and fold the softmax scale into
    # the q columns (one-time weight transform, removes per-head scaling in-kernel).
    w_qkv = params["w_qkv"].astype(jnp.float32)              # (C, 3C)
    b_qkv = params["b_qkv"].astype(jnp.float32).reshape(1, 3 * C)
    w_q = w_qkv[:, :C] * scale
    b_q = b_qkv[:, :C] * scale
    w_kv = w_qkv[:, C:]
    b_kv = b_qkv[:, C:]
    w_proj = params["w_proj"].astype(jnp.float32)            # (C, C)
    b_proj = params["b_proj"].astype(jnp.float32).reshape(1, C)

    if mxu_dtype != jnp.float32:
        # Halve HBM traffic for activations / weights; biases & accumulation stay f32.
        x1 = x1.astype(mxu_dtype)
        x2 = x2.astype(mxu_dtype)
        w_q = w_q.astype(mxu_dtype)
        w_kv = w_kv.astype(mxu_dtype)
        w_proj = w_proj.astype(mxu_dtype)

    kern = functools.partial(pwca_fused_kernel, num_heads=num_heads,
                             q_block=q_block, mxu_dtype=mxu_dtype)

    return pl.pallas_call(
        kern,
        out_shape=jax.ShapeDtypeStruct((B, N, C), out_dtype),
        grid_spec=pltpu.PrefetchScalarGridSpec(
            num_scalar_prefetch=0,
            grid=(B, N // q_block),
            in_specs=[
                pl.BlockSpec((None, N, C), lambda b, qi: (b, 0, 0)),   # x1 (N, C)
                pl.BlockSpec((None, N, C), lambda b, qi: (b, 0, 0)),   # x2 (N, C)
                pl.BlockSpec((C, C), lambda b, qi: (0, 0)),            # w_q  (scale folded)
                pl.BlockSpec((1, C), lambda b, qi: (0, 0)),            # b_q  (scale folded)
                pl.BlockSpec((C, 2 * C), lambda b, qi: (0, 0)),        # w_kv
                pl.BlockSpec((1, 2 * C), lambda b, qi: (0, 0)),        # b_kv
                pl.BlockSpec((C, C), lambda b, qi: (0, 0)),            # w_proj
                pl.BlockSpec((1, C), lambda b, qi: (0, 0)),            # b_proj
            ],
            out_specs=pl.BlockSpec((None, q_block, C), lambda b, qi: (b, qi, 0)),
            scratch_shapes=[
                pltpu.VMEM((N, C), mxu_dtype),          # scaled q for the whole sequence
                pltpu.VMEM((2 * N, 2 * C), mxu_dtype),  # stacked [k1;k2 | v1;v2]
            ],
        ),
        compiler_params=pltpu.CompilerParams(
            # batch steps shard across TensorCores (v7x); query tiles share per-batch
            # scratch so that axis stays sequential.
            dimension_semantics=("parallel", "arbitrary"),
            vmem_limit_bytes=_vmem_limit_bytes(),
        ),
    )(x1, x2, w_q, b_q, w_kv, b_kv, w_proj, b_proj)


# --------------------------------------------------------------------------
# Pure-JAX reference (for correctness checking)
# --------------------------------------------------------------------------
def pwca_reference(x1, x2, params, num_heads):
    B, N, C = x1.shape
    H = num_heads
    D = C // H
    scale = D ** (-0.5)

    def qkv_proj(x):
        y = x @ params["w_qkv"] + params["b_qkv"][0]
        y = y.reshape(B, N, 3, H, D).transpose(2, 0, 3, 1, 4)
        return y[0], y[1], y[2]

    q1, k1, v1 = qkv_proj(x1)
    _, k2, v2 = qkv_proj(x2)
    k = jnp.concatenate([k1, k2], axis=2)
    v = jnp.concatenate([v1, v2], axis=2)
    attn = jax.nn.softmax(jnp.einsum("bhqd,bhkd->bhqk", q1, k) * scale, axis=-1)
    o = jnp.einsum("bhqk,bhkd->bhqd", attn, v).transpose(0, 2, 1, 3).reshape(B, N, C)
    return o @ params["w_proj"] + params["b_proj"][0]


if __name__ == "__main__":
    def make_inputs(key, B, N, C):
        k_x1, k_x2, k_wq, k_bq, k_wp, k_bp = jax.random.split(key, 6)
        x1 = jax.random.normal(k_x1, (B, N, C), dtype=jnp.float32)
        x2 = jax.random.normal(k_x2, (B, N, C), dtype=jnp.float32)
        params = {
            # nn.Linear weights stored transposed as (Cin, Cout).
            "w_qkv": jax.random.normal(k_wq, (C, 3 * C), dtype=jnp.float32) * 0.05,
            "b_qkv": jax.random.normal(k_bq, (1, 3 * C), dtype=jnp.float32) * 0.05,
            "w_proj": jax.random.normal(k_wp, (C, C), dtype=jnp.float32) * 0.05,
            "b_proj": jax.random.normal(k_bp, (1, C), dtype=jnp.float32) * 0.05,
        }
        return x1, x2, params

    key_a, key_b = jax.random.split(jax.random.PRNGKey(0))

    # Small shapes consistent with the module: (B, N, C) = (2, 8, 32), 4 heads.
    B, N, C, H = 2, 8, 32, 4
    x1, x2, params = make_inputs(key_a, B, N, C)
    ref = pwca_reference(x1, x2, params, num_heads=H)

    # f32 MXU path: tight tolerance (only the approx softmax reciprocal differs).
    out_f32 = jax.block_until_ready(
        pwca_forward(x1, x2, params, num_heads=H, mxu_dtype=jnp.float32))
    assert out_f32.shape == (B, N, C)
    assert jnp.allclose(out_f32, ref, atol=2e-3, rtol=2e-3), "f32 path mismatch vs reference"

    # Default path: bf16 MXU operands, f32 accumulation / f32 softmax.
    out_bf16 = jax.block_until_ready(pwca_forward(x1, x2, params, num_heads=H))
    assert jnp.allclose(out_bf16, ref, atol=3e-2, rtol=3e-2), "bf16 path mismatch vs reference"

    # Exercise the query-tiled path (grid=(B, N // q_block) with >1 query tiles).
    B2, N2, C2, H2 = 2, 16, 32, 4
    x1b, x2b, params_b = make_inputs(key_b, B2, N2, C2)
    ref_b = pwca_reference(x1b, x2b, params_b, num_heads=H2)
    out_b = jax.block_until_ready(
        pwca_forward(x1b, x2b, params_b, num_heads=H2, q_block=8))
    assert jnp.allclose(out_b, ref_b, atol=3e-2, rtol=3e-2), "query-tiled path mismatch"

    print("KERNEL_OK")
</pallas_src>

<mosaic_0001>
module attributes {stable_mosaic.version = 11 : i64} {
  func.func @pwca_fused_kernel(%arg0: i32, %arg1: i32, %arg2: memref<1x8x32xf32, #tpu.memory_space<vmem>>, %arg3: memref<1x8x32xf32, #tpu.memory_space<vmem>>, %arg4: memref<32x32xf32, #tpu.memory_space<vmem>>, %arg5: memref<1x32xf32, #tpu.memory_space<vmem>>, %arg6: memref<32x64xf32, #tpu.memory_space<vmem>>, %arg7: memref<1x64xf32, #tpu.memory_space<vmem>>, %arg8: memref<32x32xf32, #tpu.memory_space<vmem>>, %arg9: memref<1x32xf32, #tpu.memory_space<vmem>>, %arg10: memref<1x8x32xf32, #tpu.memory_space<vmem>>, %arg11: memref<8x32xf32, #tpu.memory_space<vmem>>, %arg12: memref<16x64xf32, #tpu.memory_space<vmem>>) attributes {dimension_semantics = [#tpu.dimension_semantics<parallel>, #tpu.dimension_semantics<arbitrary>], iteration_bounds = array<i64: 2, 1>, scalar_prefetch = 0 : i64, scratch_operands = 2 : i64, tpu.core_type = #tpu.core_type<tc>, window_params = [{transform_indices = @transform_0, window_bounds = array<i64: 1, 8, 32>}, {transform_indices = @transform_1, window_bounds = array<i64: 1, 8, 32>}, {pipeline_mode = #tpu.pipeline_mode<synchronous>, transform_indices = @transform_2, window_bounds = array<i64: 32, 32>}, {pipeline_mode = #tpu.pipeline_mode<synchronous>, transform_indices = @transform_3, window_bounds = array<i64: 1, 32>}, {pipeline_mode = #tpu.pipeline_mode<synchronous>, transform_indices = @transform_4, window_bounds = array<i64: 32, 64>}, {pipeline_mode = #tpu.pipeline_mode<synchronous>, transform_indices = @transform_5, window_bounds = array<i64: 1, 64>}, {pipeline_mode = #tpu.pipeline_mode<synchronous>, transform_indices = @transform_6, window_bounds = array<i64: 32, 32>}, {pipeline_mode = #tpu.pipeline_mode<synchronous>, transform_indices = @transform_7, window_bounds = array<i64: 1, 32>}, {transform_indices = @transform_8, window_bounds = array<i64: 1, 8, 32>}]} {
    %c0_i32 = arith.constant 0 : i32
    %0 = arith.cmpi eq, %arg1, %c0_i32 : i32
    %1 = arith.extui %0 : i1 to i32
    %c0_i32_0 = arith.constant 0 : i32
    %2 = arith.cmpi ne, %1, %c0_i32_0 : i32
    scf.if %2 {
      %c0_33 = arith.constant 0 : index
      %c0_34 = arith.constant 0 : index
      %c0_35 = arith.constant 0 : index
      %76 = vector.load %arg2[%c0_33, %c0_34, %c0_35] : memref<1x8x32xf32, #tpu.memory_space<vmem>>, vector<1x8x32xf32>
      %77 = vector.shape_cast %76 : vector<1x8x32xf32> to vector<8x32xf32>
      %c0_36 = arith.constant 0 : index
      %c0_37 = arith.constant 0 : index
      %c0_38 = arith.constant 0 : index
      %78 = vector.load %arg3[%c0_36, %c0_37, %c0_38] : memref<1x8x32xf32, #tpu.memory_space<vmem>>, vector<1x8x32xf32>
      %79 = vector.shape_cast %78 : vector<1x8x32xf32> to vector<8x32xf32>
      %80 = tpu.concatenate %77, %79 in 0 : vector<8x32xf32>, vector<8x32xf32> -> vector<16x32xf32>
      %c0_39 = arith.constant 0 : index
      %c0_40 = arith.constant 0 : index
      %81 = vector.load %arg6[%c0_39, %c0_40] : memref<32x64xf32, #tpu.memory_space<vmem>>, vector<32x64xf32>
      %cst_41 = arith.constant dense<0.000000e+00> : vector<16x64xf32>
      %82 = tpu.matmul %80, %81, %cst_41 {dimension_numbers = #tpu.dot_dimension_numbers<[1], [0], [0], [1], [0, 0, 1, 1], [], []>} : vector<16x32xf32>, vector<32x64xf32>, vector<16x64xf32> -> vector<16x64xf32>
      %c0_42 = arith.constant 0 : index
      %c0_43 = arith.constant 0 : index
      %83 = vector.load %arg7[%c0_42, %c0_43] : memref<1x64xf32, #tpu.memory_space<vmem>>, vector<1x64xf32>
      %84 = vector.broadcast %83 : vector<1x64xf32> to vector<16x64xf32>
      %85 = arith.addf %82, %84 : vector<16x64xf32>
      %c0_44 = arith.constant 0 : index
      %c0_45 = arith.constant 0 : index
      %86 = vector.load %arg12[%c0_44, %c0_45] : memref<16x64xf32, #tpu.memory_space<vmem>>, vector<16x64xf32>
      tpu.vector_store %arg12[%c0_44, %c0_45], %85 {strides = array<i32>} : memref<16x64xf32, #tpu.memory_space<vmem>>, vector<16x64xf32>,
      %c0_46 = arith.constant 0 : index
      %c0_47 = arith.constant 0 : index
      %c0_48 = arith.constant 0 : index
      %87 = vector.load %arg2[%c0_46, %c0_47, %c0_48] : memref<1x8x32xf32, #tpu.memory_space<vmem>>, vector<1x8x32xf32>
      %88 = vector.shape_cast %87 : vector<1x8x32xf32> to vector<8x32xf32>
      %c0_49 = arith.constant 0 : index
      %c0_50 = arith.constant 0 : index
      %89 = vector.load %arg4[%c0_49, %c0_50] : memref<32x32xf32, #tpu.memory_space<vmem>>, vector<32x32xf32>
      %cst_51 = arith.constant dense<0.000000e+00> : vector<8x32xf32>
      %90 = tpu.matmul %88, %89, %cst_51 {dimension_numbers = #tpu.dot_dimension_numbers<[1], [0], [0], [1], [0, 0, 1, 1], [], []>} : vector<8x32xf32>, vector<32x32xf32>, vector<8x32xf32> -> vector<8x32xf32>
      %c0_52 = arith.constant 0 : index
      %c0_53 = arith.constant 0 : index
      %91 = vector.load %arg5[%c0_52, %c0_53] : memref<1x32xf32, #tpu.memory_space<vmem>>, vector<1x32xf32>
      %92 = vector.broadcast %91 : vector<1x32xf32> to vector<8x32xf32>
      %93 = arith.addf %90, %92 : vector<8x32xf32>
      %c0_54 = arith.constant 0 : index
      %c0_55 = arith.constant 0 : index
      %94 = vector.load %arg11[%c0_54, %c0_55] : memref<8x32xf32, #tpu.memory_space<vmem>>, vector<8x32xf32>
      tpu.vector_store %arg11[%c0_54, %c0_55], %93 {strides = array<i32>} : memref<8x32xf32, #tpu.memory_space<vmem>>, vector<8x32xf32>,
    } else {
    }
    %c8_i32 = arith.constant 8 : i32
    %3 = arith.muli %arg1, %c8_i32 : i32
    %4 = tpu.assume_multiple %3, 8 : i32
    %5 = arith.index_cast %4 : i32 to index
    %c0 = arith.constant 0 : index
    %6 = vector.load %arg11[%5, %c0] : memref<8x32xf32, #tpu.memory_space<vmem>>, vector<8x32xf32>
    %7 = vector.extract_strided_slice %6 {offsets = [0, 0], sizes = [8, 8], strides = [1, 1]} : vector<8x32xf32> to vector<8x8xf32>
    %c0_1 = arith.constant 0 : index
    %c0_2 = arith.constant 0 : index
    %8 = vector.load %arg12[%c0_1, %c0_2] : memref<16x64xf32, #tpu.memory_space<vmem>>, vector<16x8xf32>
    %c0_3 = arith.constant 0 : index
    %c32 = arith.constant 32 : index
    %9 = vector.load %arg12[%c0_3, %c32] : memref<16x64xf32, #tpu.memory_space<vmem>>, vector<16x8xf32>
    %cst = arith.constant dense<0.000000e+00> : vector<8x16xf32>
    %10 = tpu.matmul %7, %8, %cst {dimension_numbers = #tpu.dot_dimension_numbers<[1], [1], [0], [0], [0, 0, 1, 0], [], []>} : vector<8x8xf32>, vector<16x8xf32>, vector<8x16xf32> -> vector<8x16xf32>
    %cst_4 = arith.constant dense<0xFF800000> : vector<8xf32>
    %11 = vector.multi_reduction <maximumf>, %10, %cst_4 [1] : vector<8x16xf32> to vector<8xf32>
    %12 = vector.shape_cast %11 : vector<8xf32> to vector<8x1xf32>
    %13 = vector.broadcast %12 : vector<8x1xf32> to vector<8x16xf32>
    %14 = arith.subf %10, %13 : vector<8x16xf32>
    %15 = math.exp %14 : vector<8x16xf32>
    %cst_5 = arith.constant dense<0.000000e+00> : vector<8xf32>
    %16 = vector.multi_reduction <add>, %15, %cst_5 [1] : vector<8x16xf32> to vector<8xf32>
    %17 = vector.shape_cast %16 : vector<8xf32> to vector<8x1xf32>
    %18 = tpu.reciprocal %17 {approx = true} : vector<8x1xf32> -> vector<8x1xf32>
    %cst_6 = arith.constant dense<0.000000e+00> : vector<8x8xf32>
    %19 = tpu.matmul %15, %9, %cst_6 {dimension_numbers = #tpu.dot_dimension_numbers<[1], [0], [0], [1], [0, 0, 1, 1], [], []>} : vector<8x16xf32>, vector<16x8xf32>, vector<8x8xf32> -> vector<8x8xf32>
    %20 = vector.broadcast %18 : vector<8x1xf32> to vector<8x8xf32>
    %21 = arith.mulf %19, %20 : vector<8x8xf32>
    %22 = vector.extract_strided_slice %6 {offsets = [0, 8], sizes = [8, 8], strides = [1, 1]} : vector<8x32xf32> to vector<8x8xf32>
    %c0_7 = arith.constant 0 : index
    %c8 = arith.constant 8 : index
    %23 = vector.load %arg12[%c0_7, %c8] : memref<16x64xf32, #tpu.memory_space<vmem>>, vector<16x8xf32>
    %c0_8 = arith.constant 0 : index
    %c40 = arith.constant 40 : index
    %24 = vector.load %arg12[%c0_8, %c40] : memref<16x64xf32, #tpu.memory_space<vmem>>, vector<16x8xf32>
    %cst_9 = arith.constant dense<0.000000e+00> : vector<8x16xf32>
    %25 = tpu.matmul %22, %23, %cst_9 {dimension_numbers = #tpu.dot_dimension_numbers<[1], [1], [0], [0], [0, 0, 1, 0], [], []>} : vector<8x8xf32>, vector<16x8xf32>, vector<8x16xf32> -> vector<8x16xf32>
    %cst_10 = arith.constant dense<0xFF800000> : vector<8xf32>
    %26 = vector.multi_reduction <maximumf>, %25, %cst_10 [1] : vector<8x16xf32> to vector<8xf32>
    %27 = vector.shape_cast %26 : vector<8xf32> to vector<8x1xf32>
    %28 = vector.broadcast %27 : vector<8x1xf32> to vector<8x16xf32>
    %29 = arith.subf %25, %28 : vector<8x16xf32>
    %30 = math.exp %29 : vector<8x16xf32>
    %cst_11 = arith.constant dense<0.000000e+00> : vector<8xf32>
    %31 = vector.multi_reduction <add>, %30, %cst_11 [1] : vector<8x16xf32> to vector<8xf32>
    %32 = vector.shape_cast %31 : vector<8xf32> to vector<8x1xf32>
    %33 = tpu.reciprocal %32 {approx = true} : vector<8x1xf32> -> vector<8x1xf32>
    %cst_12 = arith.constant dense<0.000000e+00> : vector<8x8xf32>
    %34 = tpu.matmul %30, %24, %cst_12 {dimension_numbers = #tpu.dot_dimension_numbers<[1], [0], [0], [1], [0, 0, 1, 1], [], []>} : vector<8x16xf32>, vector<16x8xf32>, vector<8x8xf32> -> vector<8x8xf32>
    %35 = vector.broadcast %33 : vector<8x1xf32> to vector<8x8xf32>
    %36 = arith.mulf %34, %35 : vector<8x8xf32>
    %37 = vector.extract_strided_slice %6 {offsets = [0, 16], sizes = [8, 8], strides = [1, 1]} : vector<8x32xf32> to vector<8x8xf32>
    %c0_13 = arith.constant 0 : index
    %c16 = arith.constant 16 : index
    %38 = vector.load %arg12[%c0_13, %c16] : memref<16x64xf32, #tpu.memory_space<vmem>>, vector<16x8xf32>
    %c0_14 = arith.constant 0 : index
    %c48 = arith.constant 48 : index
    %39 = vector.load %arg12[%c0_14, %c48] : memref<16x64xf32, #tpu.memory_space<vmem>>, vector<16x8xf32>
    %cst_15 = arith.constant dense<0.000000e+00> : vector<8x16xf32>
    %40 = tpu.matmul %37, %38, %cst_15 {dimension_numbers = #tpu.dot_dimension_numbers<[1], [1], [0], [0], [0, 0, 1, 0], [], []>} : vector<8x8xf32>, vector<16x8xf32>, vector<8x16xf32> -> vector<8x16xf32>
    %cst_16 = arith.constant dense<0xFF800000> : vector<8xf32>
    %41 = vector.multi_reduction <maximumf>, %40, %cst_16 [1] : vector<8x16xf32> to vector<8xf32>
    %42 = vector.shape_cast %41 : vector<8xf32> to vector<8x1xf32>
    %43 = vector.broadcast %42 : vector<8x1xf32> to vector<8x16xf32>
    %44 = arith.subf %40, %43 : vector<8x16xf32>
    %45 = math.exp %44 : vector<8x16xf32>
    %cst_17 = arith.constant dense<0.000000e+00> : vector<8xf32>
    %46 = vector.multi_reduction <add>, %45, %cst_17 [1] : vector<8x16xf32> to vector<8xf32>
    %47 = vector.shape_cast %46 : vector<8xf32> to vector<8x1xf32>
    %48 = tpu.reciprocal %47 {approx = true} : vector<8x1xf32> -> vector<8x1xf32>
    %cst_18 = arith.constant dense<0.000000e+00> : vector<8x8xf32>
    %49 = tpu.matmul %45, %39, %cst_18 {dimension_numbers = #tpu.dot_dimension_numbers<[1], [0], [0], [1], [0, 0, 1, 1], [], []>} : vector<8x16xf32>, vector<16x8xf32>, vector<8x8xf32> -> vector<8x8xf32>
    %50 = vector.broadcast %48 : vector<8x1xf32> to vector<8x8xf32>
    %51 = arith.mulf %49, %50 : vector<8x8xf32>
    %52 = vector.extract_strided_slice %6 {offsets = [0, 24], sizes = [8, 8], strides = [1, 1]} : vector<8x32xf32> to vector<8x8xf32>
    %c0_19 = arith.constant 0 : index
    %c24 = arith.constant 24 : index
    %53 = vector.load %arg12[%c0_19, %c24] : memref<16x64xf32, #tpu.memory_space<vmem>>, vector<16x8xf32>
    %c0_20 = arith.constant 0 : index
    %c56 = arith.constant 56 : index
    %54 = vector.load %arg12[%c0_20, %c56] : memref<16x64xf32, #tpu.memory_space<vmem>>, vector<16x8xf32>
    %cst_21 = arith.constant dense<0.000000e+00> : vector<8x16xf32>
    %55 = tpu.matmul %52, %53, %cst_21 {dimension_numbers = #tpu.dot_dimension_numbers<[1], [1], [0], [0], [0, 0, 1, 0], [], []>} : vector<8x8xf32>, vector<16x8xf32>, vector<8x16xf32> -> vector<8x16xf32>
    %cst_22 = arith.constant dense<0xFF800000> : vector<8xf32>
    %56 = vector.multi_reduction <maximumf>, %55, %cst_22 [1] : vector<8x16xf32> to vector<8xf32>
    %57 = vector.shape_cast %56 : vector<8xf32> to vector<8x1xf32>
    %58 = vector.broadcast %57 : vector<8x1xf32> to vector<8x16xf32>
    %59 = arith.subf %55, %58 : vector<8x16xf32>
    %60 = math.exp %59 : vector<8x16xf32>
    %cst_23 = arith.constant dense<0.000000e+00> : vector<8xf32>
    %61 = vector.multi_reduction <add>, %60, %cst_23 [1] : vector<8x16xf32> to vector<8xf32>
    %62 = vector.shape_cast %61 : vector<8xf32> to vector<8x1xf32>
    %63 = tpu.reciprocal %62 {approx = true} : vector<8x1xf32> -> vector<8x1xf32>
    %cst_24 = arith.constant dense<0.000000e+00> : vector<8x8xf32>
    %64 = tpu.matmul %60, %54, %cst_24 {dimension_numbers = #tpu.dot_dimension_numbers<[1], [0], [0], [1], [0, 0, 1, 1], [], []>} : vector<8x16xf32>, vector<16x8xf32>, vector<8x8xf32> -> vector<8x8xf32>
    %65 = vector.broadcast %63 : vector<8x1xf32> to vector<8x8xf32>
    %66 = arith.mulf %64, %65 : vector<8x8xf32>
    %67 = tpu.concatenate %21, %36, %51, %66 in 1 : vector<8x8xf32>, vector<8x8xf32>, vector<8x8xf32>, vector<8x8xf32> -> vector<8x32xf32>
    %c0_25 = arith.constant 0 : index
    %c0_26 = arith.constant 0 : index
    %68 = vector.load %arg8[%c0_25, %c0_26] : memref<32x32xf32, #tpu.memory_space<vmem>>, vector<32x32xf32>
    %cst_27 = arith.constant dense<0.000000e+00> : vector<8x32xf32>
    %69 = tpu.matmul %67, %68, %cst_27 {dimension_numbers = #tpu.dot_dimension_numbers<[1], [0], [0], [1], [0, 0, 1, 1], [], []>} : vector<8x32xf32>, vector<32x32xf32>, vector<8x32xf32> -> vector<8x32xf32>
    %c0_28 = arith.constant 0 : index
    %c0_29 = arith.constant 0 : index
    %70 = vector.load %arg9[%c0_28, %c0_29] : memref<1x32xf32, #tpu.memory_space<vmem>>, vector<1x32xf32>
    %71 = vector.broadcast %70 : vector<1x32xf32> to vector<8x32xf32>
    %72 = arith.addf %69, %71 : vector<8x32xf32>
    %c0_30 = arith.constant 0 : index
    %c0_31 = arith.constant 0 : index
    %c0_32 = arith.constant 0 : index
    %73 = vector.load %arg10[%c0_30, %c0_31, %c0_32] : memref<1x8x32xf32, #tpu.memory_space<vmem>>, vector<1x8x32xf32>
    %74 = vector.shape_cast %73 : vector<1x8x32xf32> to vector<8x32xf32>
    %75 = vector.shape_cast %72 : vector<8x32xf32> to vector<1x8x32xf32>
    tpu.vector_store %arg10[%c0_30, %c0_31, %c0_32], %75 {strides = array<i32>} : memref<1x8x32xf32, #tpu.memory_space<vmem>>, vector<1x8x32xf32>,
    return
  }
  func.func @transform_0(%arg0: i32, %arg1: i32) -> (i32, i32, i32) {
    %c0_i32 = arith.constant 0 : i32
    %c0_i32_0 = arith.constant 0 : i32
    %c0_i32_1 = arith.constant 0 : i32
    return %arg0, %c0_i32, %c0_i32_0 : i32, i32, i32
  }
  func.func @transform_1(%arg0: i32, %arg1: i32) -> (i32, i32, i32) {
    %c0_i32 = arith.constant 0 : i32
    %c0_i32_0 = arith.constant 0 : i32
    %c0_i32_1 = arith.constant 0 : i32
    return %arg0, %c0_i32, %c0_i32_0 : i32, i32, i32
  }
  func.func @transform_2(%arg0: i32, %arg1: i32) -> (i32, i32) {
    %c0_i32 = arith.constant 0 : i32
    %c0_i32_0 = arith.constant 0 : i32
    %c0_i32_1 = arith.constant 0 : i32
    return %c0_i32, %c0_i32_0 : i32, i32
  }
  func.func @transform_3(%arg0: i32, %arg1: i32) -> (i32, i32) {
    %c0_i32 = arith.constant 0 : i32
    %c0_i32_0 = arith.constant 0 : i32
    %c0_i32_1 = arith.constant 0 : i32
    return %c0_i32, %c0_i32_0 : i32, i32
  }
  func.func @transform_4(%arg0: i32, %arg1: i32) -> (i32, i32) {
    %c0_i32 = arith.constant 0 : i32
    %c0_i32_0 = arith.constant 0 : i32
    %c0_i32_1 = arith.constant 0 : i32
    return %c0_i32, %c0_i32_0 : i32, i32
  }
  func.func @transform_5(%arg0: i32, %arg1: i32) -> (i32, i32) {
    %c0_i32 = arith.constant 0 : i32
    %c0_i32_0 = arith.constant 0 : i32
    %c0_i32_1 = arith.constant 0 : i32
    return %c0_i32, %c0_i32_0 : i32, i32
  }
  func.func @transform_6(%arg0: i32, %arg1: i32) -> (i32, i32) {
    %c0_i32 = arith.constant 0 : i32
    %c0_i32_0 = arith.constant 0 : i32
    %c0_i32_1 = arith.constant 0 : i32
    return %c0_i32, %c0_i32_0 : i32, i32
  }
  func.func @transform_7(%arg0: i32, %arg1: i32) -> (i32, i32) {
    %c0_i32 = arith.constant 0 : i32
    %c0_i32_0 = arith.constant 0 : i32
    %c0_i32_1 = arith.constant 0 : i32
    return %c0_i32, %c0_i32_0 : i32, i32
  }
  func.func @transform_8(%arg0: i32, %arg1: i32) -> (i32, i32, i32) {
    %c0_i32 = arith.constant 0 : i32
    %c0_i32_0 = arith.constant 0 : i32
    return %arg0, %arg1, %c0_i32 : i32, i32, i32
  }
}

</mosaic_0001>

<llo_original>
// kernel: tpu_custom_call.1
$region0: #{tpu_custom_call.1}
  #allocation0 [shape = 'u32[]', space=smem, size = 0x4, offset = 0x4, fixed_abs, tag = 'smem constant byte address 0x4 - core index']
  #allocation1 [shape = 'u32[72,128]{1,0:T(1,128)}', space=vmem, size = 0x9000, scoped, tag = 'internal scratch']
  #allocation2 [shape = 'f32[8,32]{1,0:T(8,128)}', space=vmem, size = 0x1000, scoped, tag = 'scratch operand']
  #allocation3 [shape = 'f32[16,64]{1,0:T(8,128)}', space=vmem, size = 0x2000, scoped, tag = 'scratch operand']
  %s0 = inlined_call_operand.hbm [shape: f32[2,8,32], index: 0, kind: input, shape index: {}]
  %s1 = inlined_call_operand.hbm [shape: f32[2,8,32], index: 1, kind: input, shape index: {}]
  %s2 = inlined_call_operand.hbm [shape: f32[32,32], index: 2, kind: input, shape index: {}]
  %s3 = inlined_call_operand.vmem [shape: f32[1,32], index: 3, kind: input, shape index: {}]
  %s4 = inlined_call_operand.hbm [shape: f32[32,64], index: 4, kind: input, shape index: {}]
  %s5 = inlined_call_operand.vmem [shape: f32[1,64], index: 5, kind: input, shape index: {}]
  %s6 = inlined_call_operand.hbm [shape: f32[32,32], index: 6, kind: input, shape index: {}]
  %s7 = inlined_call_operand.vmem [shape: f32[1,32], index: 7, kind: input, shape index: {}]
  %s8 = inlined_call_operand.hbm [shape: f32[2,8,32], index: 8, kind: output, shape index: {}]
  %s9 = sld [smem:[#allocation0]]
  $region89: #{tpu_custom_call.1} parent=0
    _
  %s11 = ssub.s32 1, %s9
  %s12 = scalar_select 0, %s11, %s9
  $region1: #{tpu_custom_call.1} parent=0
    #allocation4 [shape = 'u8[8192]{0}', space=vmem, size = 0x2000, scoped, tag = 'input window, operand 0']
    #allocation5 [shape = 's32[2]{0}', space=sflag, size = 0x8, scoped, tag = 'scoped memory for tpu_custom_call.1']
    #allocation6 [shape = 's32[2]{0}', space=sflag, size = 0x8, scoped, tag = 'scoped memory for tpu_custom_call.1']
    #allocation7 [shape = 'u8[8192]{0}', space=vmem, size = 0x2000, scoped, tag = 'input window, operand 1']
    #allocation8 [shape = 's32[2]{0}', space=sflag, size = 0x8, scoped, tag = 'scoped memory for tpu_custom_call.1']
    #allocation9 [shape = 'u8[16384]{0}', space=vmem, size = 0x4000, scoped, tag = 'input window, operand 2, single buffered']
    #allocation10 [shape = 'u8[16384]{0}', space=vmem, size = 0x4000, scoped, tag = 'input window, operand 4, single buffered']
    #allocation11 [shape = 's32[1]{0}', space=sflag, size = 0x4, scoped, tag = 'scoped memory for tpu_custom_call.1']
    #allocation12 [shape = 'u8[16384]{0}', space=vmem, size = 0x4000, scoped, tag = 'input window, operand 6, single buffered']
    #allocation13 [shape = 'u8[8192]{0}', space=vmem, size = 0x2000, scoped, tag = 'output window, operand 0']
    %13 = vsyncpa [#allocation5], 0
    %s14 = scalar_lea.sflag [#allocation5], 1
    %15 = vsyncpa %s14, 0
    %16 = vsyncpa [#allocation8], 0
    %s17 = scalar_lea.sflag [#allocation8], 1
    %18 = vsyncpa %s17, 0
    %19 = vsyncpa [#allocation11], 0
    %20 = vsyncpa [#allocation6], 0
    %s21 = scalar_lea.sflag [#allocation6], 1
    %22 = vsyncpa %s21, 0
    loop: start=0, step=1, limit=4
    $region2: #{tpu_custom_call.1} parent=1 // loop_pre_header
      _
    $region3: #{tpu_custom_call.1} parent=1 // loop_header
      %s24 = sphi 0, %s28
      %p25 = scmp.ge.s32.totalorder %s24, 4
      %s31 = sphi 0, %s43
      %s32 = sphi 0, %s39
      %s33 = sphi 0, %s31
      %s34 = sphi 0, %s32
      %s35 = sphi 0, %s33
      %s36 = sphi 0, %s34
      %s46 = sphi 0, %s48
      %s49 = sphi 0, %s46
      %s50 = sphi 0, %s49
      %s66 = sphi 0, %s50
      %s72 = sphi 0, %s74
      %s75 = sphi 0, %s72
      %s76 = sphi 0, %s75
      %s92 = sphi 0, %s76
      %s96 = sphi 0, %s96
      %s98 = sphi 0, %s96
      %s99 = sphi 0, %s98
      %s113 = sphi 0, %s99
      %s117 = sphi 0, %s117
      %s119 = sphi 0, %s117
      %s120 = sphi 0, %s119
      %s134 = sphi 0, %s120
      %s138 = sphi 0, %s138
      %s140 = sphi 0, %s138
      %s141 = sphi 0, %s140
      %s155 = sphi 0, %s141
      %s159 = sphi 0, %s159
      %s161 = sphi 0, %s159
      %s162 = sphi 0, %s161
      %s176 = sphi 0, %s162
      %s180 = sphi 0, %s180
      %s182 = sphi 0, %s180
      %s183 = sphi 0, %s182
      %s197 = sphi 0, %s183
      %s201 = sphi 0, %s201
      %s203 = sphi 0, %s201
      %s204 = sphi 0, %s203
      %s218 = sphi 0, %s204
      %s226 = sphi 0, %s228
      %s229 = sphi 0, %s226
      %s230 = sphi 0, %s229
      %s246 = sphi 0, %s230
    $region4: #{tpu_custom_call.1} parent=1 // loop_header_branch
      %27 = sbr.rel (%p25) target = $region8
    $region5: #{tpu_custom_call.1} parent=1 // loop_body
      %s29 = ssub.s32 %s24, 1
      %s30 = ssub.s32 %s24, 2
      %s37 = sadd.s32 1, %s32
      %p38 = scmp.ge.s32.totalorder %s37, 1
      %s39 = scalar_select %p38, 0, %s37
      %s40 = sadd.s32 1, %s31
      %s41 = scalar_select %p38, %s40, %s31
      %p42 = scmp.ge.s32.totalorder %s41, 2
      %s43 = scalar_select %p42, 0, %s41
      %s44 = ssub.s32 %s31, %s43
      %p45 = scmp.eq.s32.totalorder %s44, 0
      %s47 = sadd.s32 %s46, 1
      %s48 = scalar_select %p45, %s46, %s47
      %p51 = pneg %p45
      %p52 = scmp.eq.s32.totalorder %s24, 1
      %p53 = por %p51, %p52
      %p54 = scmp.ne.s32.totalorder %s46, %s49
      %p55 = scmp.eq.s32.totalorder %s24, 0
      %p56 = por %p54, %p55
      %p57 = scmp.ne.s32.totalorder %s46, %s49
      %p58 = scmp.eq.s32.totalorder %s29, 1
      %p59 = por %p57, %p58
      %p60 = scmp.ne.s32.totalorder %s49, %s50
      %p61 = scmp.eq.s32.totalorder %s29, 0
      %p62 = por %p60, %p61
      %p63 = scmp.ne.s32.totalorder %s49, %s50
      %p64 = scmp.eq.s32.totalorder %s30, 1
      %p65 = por %p63, %p64
      %p67 = scmp.ne.s32.totalorder %s50, %s66
      %p68 = scmp.eq.s32.totalorder %s30, 0
      %p69 = por %p67, %p68
      %s70 = ssub.s32 %s31, %s43
      %p71 = scmp.eq.s32.totalorder %s70, 0
      %s73 = sadd.s32 %s72, 1
      %s74 = scalar_select %p71, %s72, %s73
      %p77 = pneg %p71
      %p78 = scmp.eq.s32.totalorder %s24, 1
      %p79 = por %p77, %p78
      %p80 = scmp.ne.s32.totalorder %s72, %s75
      %p81 = scmp.eq.s32.totalorder %s24, 0
      %p82 = por %p80, %p81
      %p83 = scmp.ne.s32.totalorder %s72, %s75
      %p84 = scmp.eq.s32.totalorder %s29, 1
      %p85 = por %p83, %p84
      %p86 = scmp.ne.s32.totalorder %s75, %s76
      %p87 = scmp.eq.s32.totalorder %s29, 0
      %p88 = por %p86, %p87
      %p89 = scmp.ne.s32.totalorder %s75, %s76
      %p90 = scmp.eq.s32.totalorder %s30, 1
      %p91 = por %p89, %p90
      %p93 = scmp.ne.s32.totalorder %s76, %s92
      %p94 = scmp.eq.s32.totalorder %s30, 0
      %p95 = por %p93, %p94
      %s97 = sadd.s32 %s96, 1
      %p100 = scmp.eq.s32.totalorder %s24, 1
      %p101 = scmp.ne.s32.totalorder %s96, %s98
      %p102 = scmp.eq.s32.totalorder %s24, 0
      %p103 = por %p101, %p102
      %p104 = scmp.ne.s32.totalorder %s96, %s98
      %p105 = scmp.eq.s32.totalorder %s29, 1
      %p106 = por %p104, %p105
      %p107 = scmp.ne.s32.totalorder %s98, %s99
      %p108 = scmp.eq.s32.totalorder %s29, 0
      %p109 = por %p107, %p108
      %p110 = scmp.ne.s32.totalorder %s98, %s99
      %p111 = scmp.eq.s32.totalorder %s30, 1
      %p112 = por %p110, %p111
      %p114 = scmp.ne.s32.totalorder %s99, %s113
      %p115 = scmp.eq.s32.totalorder %s30, 0
      %p116 = por %p114, %p115
      %s118 = sadd.s32 %s117, 1
      %p121 = scmp.eq.s32.totalorder %s24, 1
      %p122 = scmp.ne.s32.totalorder %s117, %s119
      %p123 = scmp.eq.s32.totalorder %s24, 0
      %p124 = por %p122, %p123
      %p125 = scmp.ne.s32.totalorder %s117, %s119
      %p126 = scmp.eq.s32.totalorder %s29, 1
      %p127 = por %p125, %p126
      %p128 = scmp.ne.s32.totalorder %s119, %s120
      %p129 = scmp.eq.s32.totalorder %s29, 0
      %p130 = por %p128, %p129
      %p131 = scmp.ne.s32.totalorder %s119, %s120
      %p132 = scmp.eq.s32.totalorder %s30, 1
      %p133 = por %p131, %p132
      %p135 = scmp.ne.s32.totalorder %s120, %s134
      %p136 = scmp.eq.s32.totalorder %s30, 0
      %p137 = por %p135, %p136
      %s139 = sadd.s32 %s138, 1
      %p142 = scmp.eq.s32.totalorder %s24, 1
      %p143 = scmp.ne.s32.totalorder %s138, %s140
      %p144 = scmp.eq.s32.totalorder %s24, 0
      %p145 = por %p143, %p144
      %p146 = scmp.ne.s32.totalorder %s138, %s140
      %p147 = scmp.eq.s32.totalorder %s29, 1
      %p148 = por %p146, %p147
      %p149 = scmp.ne.s32.totalorder %s140, %s141
      %p150 = scmp.eq.s32.totalorder %s29, 0
      %p151 = por %p149, %p150
      %p152 = scmp.ne.s32.totalorder %s140, %s141
      %p153 = scmp.eq.s32.totalorder %s30, 1
      %p154 = por %p152, %p153
      %p156 = scmp.ne.s32.totalorder %s141, %s155
      %p157 = scmp.eq.s32.totalorder %s30, 0
      %p158 = por %p156, %p157
      %s160 = sadd.s32 %s159, 1
      %p163 = scmp.eq.s32.totalorder %s24, 1
      %p164 = scmp.ne.s32.totalorder %s159, %s161
      %p165 = scmp.eq.s32.totalorder %s24, 0
      %p166 = por %p164, %p165
      %p167 = scmp.ne.s32.totalorder %s159, %s161
      %p168 = scmp.eq.s32.totalorder %s29, 1
      %p169 = por %p167, %p168
      %p170 = scmp.ne.s32.totalorder %s161, %s162
      %p171 = scmp.eq.s32.totalorder %s29, 0
      %p172 = por %p170, %p171
      %p173 = scmp.ne.s32.totalorder %s161, %s162
      %p174 = scmp.eq.s32.totalorder %s30, 1
      %p175 = por %p173, %p174
      %p177 = scmp.ne.s32.totalorder %s162, %s176
      %p178 = scmp.eq.s32.totalorder %s30, 0
      %p179 = por %p177, %p178
      %s181 = sadd.s32 %s180, 1
      %p184 = scmp.eq.s32.totalorder %s24, 1
      %p185 = scmp.ne.s32.totalorder %s180, %s182
      %p186 = scmp.eq.s32.totalorder %s24, 0
      %p187 = por %p185, %p186
      %p188 = scmp.ne.s32.totalorder %s180, %s182
      %p189 = scmp.eq.s32.totalorder %s29, 1
      %p190 = por %p188, %p189
      %p191 = scmp.ne.s32.totalorder %s182, %s183
      %p192 = scmp.eq.s32.totalorder %s29, 0
      %p193 = por %p191, %p192
      %p194 = scmp.ne.s32.totalorder %s182, %s183
      %p195 = scmp.eq.s32.totalorder %s30, 1
      %p196 = por %p194, %p195
      %p198 = scmp.ne.s32.totalorder %s183, %s197
      %p199 = scmp.eq.s32.totalorder %s30, 0
      %p200 = por %p198, %p199
      %s202 = sadd.s32 %s201, 1
      %p205 = scmp.eq.s32.totalorder %s24, 1
      %p206 = scmp.ne.s32.totalorder %s201, %s203
      %p207 = scmp.eq.s32.totalorder %s24, 0
      %p208 = por %p206, %p207
      %p209 = scmp.ne.s32.totalorder %s201, %s203
      %p210 = scmp.eq.s32.totalorder %s29, 1
      %p211 = por %p209, %p210
      %p212 = scmp.ne.s32.totalorder %s203, %s204
      %p213 = scmp.eq.s32.totalorder %s29, 0
      %p214 = por %p212, %p213
      %p215 = scmp.ne.s32.totalorder %s203, %s204
      %p216 = scmp.eq.s32.totalorder %s30, 1
      %p217 = por %p215, %p216
      %p219 = scmp.ne.s32.totalorder %s204, %s218
      %p220 = scmp.eq.s32.totalorder %s30, 0
      %p221 = por %p219, %p220
      %s222 = ssub.s32 %s31, %s43
      %s223 = ssub.s32 %s32, %s39
      %s224 = sor.u32 %s222, %s223
      %p225 = scmp.eq.s32.totalorder %s224, 0
      %s227 = sadd.s32 %s226, 1
      %s228 = scalar_select %p225, %s226, %s227
      %p231 = pneg %p225
      %p232 = scmp.eq.s32.totalorder %s24, 1
      %p233 = por %p231, %p232
      %p234 = scmp.ne.s32.totalorder %s226, %s229
      %p235 = scmp.eq.s32.totalorder %s24, 0
      %p236 = por %p234, %p235
      %p237 = scmp.ne.s32.totalorder %s226, %s229
      %p238 = scmp.eq.s32.totalorder %s29, 1
      %p239 = por %p237, %p238
      %p240 = scmp.ne.s32.totalorder %s229, %s230
      %p241 = scmp.eq.s32.totalorder %s29, 0
      %p242 = por %p240, %p241
      %p243 = scmp.ne.s32.totalorder %s229, %s230
      %p244 = scmp.eq.s32.totalorder %s30, 1
      %p245 = por %p243, %p244
      %p247 = scmp.ne.s32.totalorder %s230, %s246
      %p248 = scmp.eq.s32.totalorder %s30, 0
      %p249 = por %p247, %p248
      %p250 = scmp.le.s32.totalorder 1, %s24
      %p251 = scmp.lt.s32.totalorder %s24, 3
      %p252 = pnand %p250, %p251
      %p253 = pneg %p252
      // Predicated region
      $region9: #{tpu_custom_call.1} parent=5 // pred_check
        _
      $region10: #{tpu_custom_call.1} parent=5 // pred_check_branch
        %255 = sbr.rel (%p252) target = $region12
      $region11: #{tpu_custom_call.1} parent=5 // pred_region
        %s256 = ssub.s32 %s24, 1
        // Predicated region
        $region13: #{tpu_custom_call.1} parent=11 // pred_check
          %p257 = pneg %p109
        $region14: #{tpu_custom_call.1} parent=11 // pred_check_branch
          %259 = sbr.rel (%p257) target = $region16
        $region15: #{tpu_custom_call.1} parent=11 // pred_region
          %261 = vsyncadd [#allocation8], 0
          %s262 = sshll.u32 %s2, 4
          %s263 = int_to_ptr.hbm [resolvable:$true] %s262
          %s264 = sshll.u32 [#allocation9], 4
          %s265 = int_to_ptr.vmem [resolvable:$true] %s264
          %270 = dma.hbm_to_vmem [thread:$0]  %s263, 512, %s265, [#allocation8], 128, 128, 8
        $region16: #{tpu_custom_call.1} parent=11 // pred_fallthru
          _
        // Predicated region
        $region17: #{tpu_custom_call.1} parent=11 // pred_check
          %p271 = pneg %p130
        $region18: #{tpu_custom_call.1} parent=11 // pred_check_branch
          %273 = sbr.rel (%p271) target = $region20
        $region19: #{tpu_custom_call.1} parent=11 // pred_region
          _
        $region20: #{tpu_custom_call.1} parent=11 // pred_fallthru
          _
        // Predicated region
        $region21: #{tpu_custom_call.1} parent=11 // pred_check
          %p274 = pneg %p151
        $region22: #{tpu_custom_call.1} parent=11 // pred_check_branch
          %276 = sbr.rel (%p274) target = $region24
        $region23: #{tpu_custom_call.1} parent=11 // pred_region
          %278 = vsyncadd [#allocation11], 0
          %s279 = sshll.u32 %s4, 4
          %s280 = int_to_ptr.hbm [resolvable:$true] %s279
          %s281 = sshll.u32 [#allocation10], 4
          %s282 = int_to_ptr.vmem [resolvable:$true] %s281
          %287 = dma.hbm_to_vmem [thread:$0]  %s280, 512, %s282, [#allocation11], 128, 128, 8
        $region24: #{tpu_custom_call.1} parent=11 // pred_fallthru
          _
        // Predicated region
        $region25: #{tpu_custom_call.1} parent=11 // pred_check
          %p288 = pneg %p172
        $region26: #{tpu_custom_call.1} parent=11 // pred_check_branch
          %290 = sbr.rel (%p288) target = $region28
        $region27: #{tpu_custom_call.1} parent=11 // pred_region
          _
        $region28: #{tpu_custom_call.1} parent=11 // pred_fallthru
          _
        // Predicated region
        $region29: #{tpu_custom_call.1} parent=11 // pred_check
          %p291 = pneg %p193
        $region30: #{tpu_custom_call.1} parent=11 // pred_check_branch
          %293 = sbr.rel (%p291) target = $region32
        $region31: #{tpu_custom_call.1} parent=11 // pred_region
          %295 = vsyncadd [#allocation11], 0
          %s296 = sshll.u32 %s6, 4
          %s297 = int_to_ptr.hbm [resolvable:$true] %s296
          %s298 = sshll.u32 [#allocation12], 4
          %s299 = int_to_ptr.vmem [resolvable:$true] %s298
          %304 = dma.hbm_to_vmem [thread:$0]  %s297, 512, %s299, [#allocation11], 128, 128, 8
        $region32: #{tpu_custom_call.1} parent=11 // pred_fallthru
          _
        // Predicated region
        $region33: #{tpu_custom_call.1} parent=11 // pred_check
          %p305 = pneg %p214
        $region34: #{tpu_custom_call.1} parent=11 // pred_check_branch
          %307 = sbr.rel (%p305) target = $region36
        $region35: #{tpu_custom_call.1} parent=11 // pred_region
          _
        $region36: #{tpu_custom_call.1} parent=11 // pred_fallthru
          _
      $region12: #{tpu_custom_call.1} parent=5 // pred_fallthru
        _
      %p308 = scmp.lt.s32.totalorder %s24, 2
      // Predicated region
      $region37: #{tpu_custom_call.1} parent=5 // pred_check
        %p309 = pneg %p308
      $region38: #{tpu_custom_call.1} parent=5 // pred_check_branch
        %311 = sbr.rel (%p309) target = $region40
      $region39: #{tpu_custom_call.1} parent=5 // pred_region
        // Predicated region
        $region41: #{tpu_custom_call.1} parent=39 // pred_check
          %p312 = pneg %p56
        $region42: #{tpu_custom_call.1} parent=39 // pred_check_branch
          %314 = sbr.rel (%p312) target = $region44
        $region43: #{tpu_custom_call.1} parent=39 // pred_region
          %s315 = sand.u32 %s46, 1
          %s316 = scalar_lea.sflag [#allocation5], %s315
          %s317 = sand.u32 %s46, 1
          %s318 = smul.addr %s317, 8
          %s319 = scalar_lea.vmem [#allocation4], %s318
          %321 = vsyncadd %s316, 0
          %s322 = smul.addr %s31, 8
          %s323 = scalar_lea.hbm %s0, %s322
          %s325 = sshll.u32 %s323, 4
          %s326 = int_to_ptr.hbm [resolvable:$true] %s325
          %s327 = sshll.u32 %s319, 4
          %s328 = int_to_ptr.vmem [resolvable:$true] %s327
          %330 = dma.hbm_to_vmem [thread:$0]  %s326, 128, %s328, %s316
        $region44: #{tpu_custom_call.1} parent=39 // pred_fallthru
          _
        // Predicated region
        $region45: #{tpu_custom_call.1} parent=39 // pred_check
          %p331 = pneg %p82
        $region46: #{tpu_custom_call.1} parent=39 // pred_check_branch
          %333 = sbr.rel (%p331) target = $region48
        $region47: #{tpu_custom_call.1} parent=39 // pred_region
          %s334 = sand.u32 %s24, 1
          %s335 = scalar_lea.sflag [#allocation8], %s334
          %s336 = sand.u32 %s72, 1
          %s337 = smul.addr %s336, 8
          %s338 = scalar_lea.vmem [#allocation7], %s337
          %340 = vsyncadd %s335, 0
          %s341 = smul.addr %s31, 8
          %s342 = scalar_lea.hbm %s1, %s341
          %s344 = sshll.u32 %s342, 4
          %s345 = int_to_ptr.hbm [resolvable:$true] %s344
          %s346 = sshll.u32 %s338, 4
          %s347 = int_to_ptr.vmem [resolvable:$true] %s346
          %349 = dma.hbm_to_vmem [thread:$0]  %s345, 128, %s347, %s335
        $region48: #{tpu_custom_call.1} parent=39 // pred_fallthru
          _
      $region40: #{tpu_custom_call.1} parent=5 // pred_fallthru
        _
      %p350 = scmp.le.s32.totalorder 1, %s24
      %p351 = scmp.lt.s32.totalorder %s24, 3
      %p352 = pnand %p350, %p351
      %p353 = pneg %p352
      // Predicated region
      $region49: #{tpu_custom_call.1} parent=5 // pred_check
        _
      $region50: #{tpu_custom_call.1} parent=5 // pred_check_branch
        %355 = sbr.rel (%p352) target = $region52
      $region51: #{tpu_custom_call.1} parent=5 // pred_region
        %s356 = ssub.s32 %s24, 1
        %s357 = sand.u32 %s49, 1
        %s358 = scalar_lea.sflag [#allocation5], %s357
        %s359 = sand.u32 %s49, 1
        %s360 = smul.addr %s359, 8
        %s361 = scalar_lea.vmem [#allocation4], %s360
        // Predicated region
        $region53: #{tpu_custom_call.1} parent=51 // pred_check
          %p362 = pneg %p62
        $region54: #{tpu_custom_call.1} parent=51 // pred_check_branch
          %364 = sbr.rel (%p362) target = $region56
        $region55: #{tpu_custom_call.1} parent=51 // pred_region
          %366 = dma.done %s358, 128
        $region56: #{tpu_custom_call.1} parent=51 // pred_fallthru
          _
        %s367 = sand.u32 %s29, 1
        %s368 = scalar_lea.sflag [#allocation8], %s367
        %s369 = sand.u32 %s75, 1
        %s370 = smul.addr %s369, 8
        %s371 = scalar_lea.vmem [#allocation7], %s370
        // Predicated region
        $region57: #{tpu_custom_call.1} parent=51 // pred_check
          %p372 = pneg %p88
        $region58: #{tpu_custom_call.1} parent=51 // pred_check_branch
          %374 = sbr.rel (%p372) target = $region60
        $region59: #{tpu_custom_call.1} parent=51 // pred_region
          %376 = dma.done %s368, 128
        $region60: #{tpu_custom_call.1} parent=51 // pred_fallthru
          _
        // Predicated region
        $region61: #{tpu_custom_call.1} parent=51 // pred_check
          %p377 = pneg %p109
        $region62: #{tpu_custom_call.1} parent=51 // pred_check_branch
          %379 = sbr.rel (%p377) target = $region64
        $region63: #{tpu_custom_call.1} parent=51 // pred_region
          %381 = dma.done [#allocation8], 512
        $region64: #{tpu_custom_call.1} parent=51 // pred_fallthru
          _
        // Predicated region
        $region65: #{tpu_custom_call.1} parent=51 // pred_check
          %p382 = pneg %p151
        $region66: #{tpu_custom_call.1} parent=51 // pred_check_branch
          %384 = sbr.rel (%p382) target = $region68
        $region67: #{tpu_custom_call.1} parent=51 // pred_region
          %386 = dma.done [#allocation11], 512
        $region68: #{tpu_custom_call.1} parent=51 // pred_fallthru
          _
        // Predicated region
        $region69: #{tpu_custom_call.1} parent=51 // pred_check
          %p387 = pneg %p193
        $region70: #{tpu_custom_call.1} parent=51 // pred_check_branch
          %389 = sbr.rel (%p387) target = $region72
        $region71: #{tpu_custom_call.1} parent=51 // pred_region
          %391 = dma.done [#allocation11], 512
        $region72: #{tpu_custom_call.1} parent=51 // pred_fallthru
          _
        %s392 = sand.u32 %s49, 1
        %s393 = scalar_lea.sflag [#allocation5], %s392
        %s394 = sand.u32 %s49, 1
        %s395 = smul.addr %s394, 8
        %s396 = scalar_lea.vmem [#allocation4], %s395
        %p397 = pneg %p62
        %p398 = pneg %p59
        %s399 = sand.u32 %s29, 1
        %s400 = scalar_lea.sflag [#allocation8], %s399
        %s401 = sand.u32 %s75, 1
        %s402 = smul.addr %s401, 8
        %s403 = scalar_lea.vmem [#allocation7], %s402
        %p404 = pneg %p88
        %p405 = pneg %p85
        %p406 = pneg %p109
        %p407 = pneg %p106
        %p408 = pneg %p130
        %p409 = pneg %p127
        %p410 = pneg %p151
        %p411 = pneg %p148
        %p412 = pneg %p172
        %p413 = pneg %p169
        %p414 = pneg %p193
        %p415 = pneg %p190
        %p416 = pneg %p214
        %p417 = pneg %p211
        %p418 = pneg %p242
        %p419 = pneg %p239
        %s420 = sand.u32 %s229, 1
        %s421 = scalar_lea.sflag [#allocation6], %s420
        %s422 = sand.u32 %s229, 1
        %s423 = smul.addr %s422, 8
        %s424 = scalar_lea.vmem [#allocation13], %s423
        %p425 = scmp.eq.s32.totalorder %s34, 0
        // Predicated region
        $region73: #{tpu_custom_call.1} parent=51 // pred_check
          %p426 = pneg %p425
        $region74: #{tpu_custom_call.1} parent=51 // pred_check_branch
          %428 = sbr.rel (%p426) target = $region76
        $region75: #{tpu_custom_call.1} parent=51 // pred_region
          %v429 = vld [vmem:[%s361] sm:$0xff]
          %v430 = vld [vmem:[%s371] sm:$0xff]
          %v431 = vld [vmem:[#allocation10] sm:$0xff]
          %v432 = vld [vmem:[#allocation10 + $0x8] sm:$0xff]
          %v433 = vld [vmem:[#allocation10 + $0x10] sm:$0xff]
          %v434 = vld [vmem:[#allocation10 + $0x18] sm:$0xff]
          %v435 = vld [vmem:[%s5] sm:$0x1]
          %v437 = vperm.slane %v435, 0
          %vm439 = vcmask 261120
          %v441 = vsel %vm439, %v429, 0
          %v444 = vsel %vm439, %v430, 0
          %446 = vmatpush.msra.mxu0 0.0
          %447 = vmatpush.msra.mxu0 0.0
          %448 = vmatpush.msra.mxu0 0.0
          %449 = vmatpush.msra.mxu0 0.0
          %450 = vmatpush.msra.mxu0 0.0
          %451 = vmatpush.msra.mxu0 0.0
          %452 = vmatpush.msra.mxu0 0.0
          %453 = vmatpush.msra.mxu0 0.0
          %454 = vmatpush.msra.mxu0 0.0
          %455 = vmatpush.msra.mxu0 0.0
          %456 = vmatpush.msra.mxu0 0.0
          %457 = vmatpush.msra.mxu0 0.0
          %458 = vmatpush.msra.mxu0 %v434
          %459 = vmatpush.msra.mxu0 %v433
          %460 = vmatpush.msra.mxu0 %v432
          %461 = vmatpush.msra.mxu0 %v431
          %462 = vmatmul.f32.gmra.mxu0 %v441
          %v463 = vpop.f32.mrf.mxu0
          %v464 = vadd.f32 %v437, %v463
          %465 = vmatmul.f32.gmra.mxu0 %v444
          %v466 = vpop.f32.mrf.mxu0
          %v467 = vadd.f32 %v437, %v466
          %468 = vdwg.mxu0
          %vm469 = vcmask 523264
          %470 = vst.msk [vmem:[#allocation3] sm:$0xff] %vm469, %v464
          %471 = vst.msk [vmem:[#allocation3 + $0x8] sm:$0xff] %vm469, %v467
          %v472 = vld [vmem:[%s361] sm:$0xff]
          %v473 = vld [vmem:[#allocation9] sm:$0xff]
          %v474 = vld [vmem:[#allocation9 + $0x8] sm:$0xff]
          %v475 = vld [vmem:[#allocation9 + $0x10] sm:$0xff]
          %v476 = vld [vmem:[#allocation9 + $0x18] sm:$0xff]
          %v477 = vld [vmem:[%s3] sm:$0x1]
          %v479 = vperm.slane %v477, 0
          %v482 = vsel %vm439, %v472, 0
          %484 = vmatpush.msra.mxu0 0.0
          %485 = vmatpush.msra.mxu0 0.0
          %486 = vmatpush.msra.mxu0 0.0
          %487 = vmatpush.msra.mxu0 0.0
          %488 = vmatpush.msra.mxu0 0.0
          %489 = vmatpush.msra.mxu0 0.0
          %490 = vmatpush.msra.mxu0 0.0
          %491 = vmatpush.msra.mxu0 0.0
          %492 = vmatpush.msra.mxu0 0.0
          %493 = vmatpush.msra.mxu0 0.0
          %494 = vmatpush.msra.mxu0 0.0
          %495 = vmatpush.msra.mxu0 0.0
          %496 = vmatpush.msra.mxu0 %v476
          %497 = vmatpush.msra.mxu0 %v475
          %498 = vmatpush.msra.mxu0 %v474
          %499 = vmatpush.msra.mxu0 %v473
          %500 = vmatmul.f32.gmra.mxu0 %v482
          %v501 = vpop.f32.mrf.mxu0
          %v502 = vadd.f32 %v479, %v501
          %503 = vdwg.mxu0
          %504 = vst.msk [vmem:[#allocation2] sm:$0xff] %vm439, %v502
        $region76: #{tpu_custom_call.1} parent=51 // pred_fallthru
          _
        %s505 = smul.u32 %s34, 8
        %s506 = scalar_lea.vmem [#allocation2], %s505
        %v507 = vld [vmem:[%s506] sm:$0xff]
        %v508 = vld [vmem:[#allocation3] sm:$0xff]
        %v509 = vld [vmem:[#allocation3 + $0x8] sm:$0xff]
        %vm510 = vcmask 64512
        %v512 = vsel %vm510, %v507, 0
        %v515 = vsel %vm510, %v508, 0
        %v518 = vsel %vm510, %v509, 0
        %520 = vmatpush.xpose.msra.mxu0 0.0
        %521 = vmatpush.xpose.msra.mxu0 0.0
        %522 = vmatpush.xpose.msra.mxu0 0.0
        %523 = vmatpush.xpose.msra.mxu0 0.0
        %524 = vmatpush.xpose.msra.mxu0 0.0
        %525 = vmatpush.xpose.msra.mxu0 0.0
        %526 = vmatpush.xpose.msra.mxu0 0.0
        %527 = vmatpush.xpose.msra.mxu0 0.0
        %528 = vmatpush.xpose.msra.mxu0 0.0
        %529 = vmatpush.xpose.msra.mxu0 0.0
        %530 = vmatpush.xpose.msra.mxu0 0.0
        %531 = vmatpush.xpose.msra.mxu0 0.0
        %532 = vmatpush.xpose.msra.mxu0 0.0
        %533 = vmatpush.xpose.msra.mxu0 0.0
        %534 = vmatpush.xpose.msra.mxu0 %v518
        %535 = vmatpush.xpose.msra.mxu0 %v515
        %536 = vmatmul.f32.gmra.mxu0 %v512
        %v537 = vpop.f32.mrf.mxu0
        %v538 = vadd.f32 0.0, %v537
        %539 = vdwg.mxu0
        %vm540 = vcmask 130048
        %v541 = vsel %vm540, %v538, -inf
        %542 = vmax.xlane.f32.xlu0 %v541
        %v543 = vpop.xlane.xlu0 %542
        %v544 = vsub.f32 %v538, %v543
        %v545 = vmul.f32 %v544, 1.442695
        %v546 = vpow.pop %v545
        %v547 = vsel %vm540, %v546, 0.0
        %548 = vadd.xlane.f32.xlu0 %v547
        %v549 = vpop.xlane.xlu0 %548
        %v550 = vrcp.pop %v549
        %551 = vrot.lane.b32.xlu0 %v508, 96
        %v552 = vpop.permute.xlu0 %551
        %553 = vrot.lane.b32.xlu0 %v509, 96
        %v554 = vpop.permute.xlu0 %553
        %v558 = vsel %vm540, %v546, 0
        %560 = vmatpush.msra.mxu0 0.0
        %561 = vmatpush.msra.mxu0 0.0
        %562 = vmatpush.msra.mxu0 0.0
        %563 = vmatpush.msra.mxu0 0.0
        %564 = vmatpush.msra.mxu0 0.0
        %565 = vmatpush.msra.mxu0 0.0
        %566 = vmatpush.msra.mxu0 0.0
        %567 = vmatpush.msra.mxu0 0.0
        %568 = vmatpush.msra.mxu0 0.0
        %569 = vmatpush.msra.mxu0 0.0
        %570 = vmatpush.msra.mxu0 0.0
        %571 = vmatpush.msra.mxu0 0.0
        %572 = vmatpush.msra.mxu0 0.0
        %573 = vmatpush.msra.mxu0 0.0
        %574 = vmatpush.msra.mxu0 %v554
        %575 = vmatpush.msra.mxu0 %v552
        %576 = vmatmul.f32.gmra.mxu0 %v558
        %v577 = vpop.f32.mrf.mxu0
        %v578 = vadd.f32 0.0, %v577
        %579 = vdwg.mxu0
        %v580 = vmul.f32 %v578, %v550
        %581 = vrot.lane.b32.xlu0 %v507, 120
        %v582 = vpop.permute.xlu0 %581
        %583 = vrot.lane.b32.xlu0 %v508, 120
        %v584 = vpop.permute.xlu0 %583
        %585 = vrot.lane.b32.xlu0 %v509, 120
        %v586 = vpop.permute.xlu0 %585
        %v587 = vsel %vm510, %v582, 0
        %v589 = vsel %vm510, %v584, 0
        %v591 = vsel %vm510, %v586, 0
        %593 = vmatpush.xpose.msra.mxu0 0.0
        %594 = vmatpush.xpose.msra.mxu0 0.0
        %595 = vmatpush.xpose.msra.mxu0 0.0
        %596 = vmatpush.xpose.msra.mxu0 0.0
        %597 = vmatpush.xpose.msra.mxu0 0.0
        %598 = vmatpush.xpose.msra.mxu0 0.0
        %599 = vmatpush.xpose.msra.mxu0 0.0
        %600 = vmatpush.xpose.msra.mxu0 0.0
        %601 = vmatpush.xpose.msra.mxu0 0.0
        %602 = vmatpush.xpose.msra.mxu0 0.0
        %603 = vmatpush.xpose.msra.mxu0 0.0
        %604 = vmatpush.xpose.msra.mxu0 0.0
        %605 = vmatpush.xpose.msra.mxu0 0.0
        %606 = vmatpush.xpose.msra.mxu0 0.0
        %607 = vmatpush.xpose.msra.mxu0 %v591
        %608 = vmatpush.xpose.msra.mxu0 %v589
        %609 = vmatmul.f32.gmra.mxu0 %v587
        %v610 = vpop.f32.mrf.mxu0
        %v611 = vadd.f32 0.0, %v610
        %612 = vdwg.mxu0
        %v613 = vsel %vm540, %v611, -inf
        %614 = vmax.xlane.f32.xlu0 %v613
        %v615 = vpop.xlane.xlu0 %614
        %v616 = vsub.f32 %v611, %v615
        %v617 = vmul.f32 %v616, 1.442695
        %v618 = vpow.pop %v617
        %v619 = vsel %vm540, %v618, 0.0
        %620 = vadd.xlane.f32.xlu0 %v619
        %v621 = vpop.xlane.xlu0 %620
        %v622 = vrcp.pop %v621
        %623 = vrot.lane.b32.xlu0 %v508, 88
        %v624 = vpop.permute.xlu0 %623
        %625 = vrot.lane.b32.xlu0 %v509, 88
        %v626 = vpop.permute.xlu0 %625
        %v630 = vsel %vm540, %v618, 0
        %632 = vmatpush.msra.mxu0 0.0
        %633 = vmatpush.msra.mxu0 0.0
        %634 = vmatpush.msra.mxu0 0.0
        %635 = vmatpush.msra.mxu0 0.0
        %636 = vmatpush.msra.mxu0 0.0
        %637 = vmatpush.msra.mxu0 0.0
        %638 = vmatpush.msra.mxu0 0.0
        %639 = vmatpush.msra.mxu0 0.0
        %640 = vmatpush.msra.mxu0 0.0
        %641 = vmatpush.msra.mxu0 0.0
        %642 = vmatpush.msra.mxu0 0.0
        %643 = vmatpush.msra.mxu0 0.0
        %644 = vmatpush.msra.mxu0 0.0
        %645 = vmatpush.msra.mxu0 0.0
        %646 = vmatpush.msra.mxu0 %v626
        %647 = vmatpush.msra.mxu0 %v624
        %648 = vmatmul.f32.gmra.mxu0 %v630
        %v649 = vpop.f32.mrf.mxu0
        %v650 = vadd.f32 0.0, %v649
        %651 = vdwg.mxu0
        %v652 = vmul.f32 %v650, %v622
        %653 = vrot.lane.b32.xlu0 %v507, 112
        %v654 = vpop.permute.xlu0 %653
        %655 = vrot.lane.b32.xlu0 %v508, 112
        %v656 = vpop.permute.xlu0 %655
        %657 = vrot.lane.b32.xlu0 %v509, 112
        %v658 = vpop.permute.xlu0 %657
        %v659 = vsel %vm510, %v654, 0
        %v661 = vsel %vm510, %v656, 0
        %v663 = vsel %vm510, %v658, 0
        %665 = vmatpush.xpose.msra.mxu0 0.0
        %666 = vmatpush.xpose.msra.mxu0 0.0
        %667 = vmatpush.xpose.msra.mxu0 0.0
        %668 = vmatpush.xpose.msra.mxu0 0.0
        %669 = vmatpush.xpose.msra.mxu0 0.0
        %670 = vmatpush.xpose.msra.mxu0 0.0
        %671 = vmatpush.xpose.msra.mxu0 0.0
        %672 = vmatpush.xpose.msra.mxu0 0.0
        %673 = vmatpush.xpose.msra.mxu0 0.0
        %674 = vmatpush.xpose.msra.mxu0 0.0
        %675 = vmatpush.xpose.msra.mxu0 0.0
        %676 = vmatpush.xpose.msra.mxu0 0.0
        %677 = vmatpush.xpose.msra.mxu0 0.0
        %678 = vmatpush.xpose.msra.mxu0 0.0
        %679 = vmatpush.xpose.msra.mxu0 %v663
        %680 = vmatpush.xpose.msra.mxu0 %v661
        %681 = vmatmul.f32.gmra.mxu0 %v659
        %v682 = vpop.f32.mrf.mxu0
        %v683 = vadd.f32 0.0, %v682
        %684 = vdwg.mxu0
        %v685 = vsel %vm540, %v683, -inf
        %686 = vmax.xlane.f32.xlu0 %v685
        %v687 = vpop.xlane.xlu0 %686
        %v688 = vsub.f32 %v683, %v687
        %v689 = vmul.f32 %v688, 1.442695
        %v690 = vpow.pop %v689
        %v691 = vsel %vm540, %v690, 0.0
        %692 = vadd.xlane.f32.xlu0 %v691
        %v693 = vpop.xlane.xlu0 %692
        %v694 = vrcp.pop %v693
        %695 = vrot.lane.b32.xlu0 %v508, 80
        %v696 = vpop.permute.xlu0 %695
        %697 = vrot.lane.b32.xlu0 %v509, 80
        %v698 = vpop.permute.xlu0 %697
        %v702 = vsel %vm540, %v690, 0
        %704 = vmatpush.msra.mxu0 0.0
        %705 = vmatpush.msra.mxu0 0.0
        %706 = vmatpush.msra.mxu0 0.0
        %707 = vmatpush.msra.mxu0 0.0
        %708 = vmatpush.msra.mxu0 0.0
        %709 = vmatpush.msra.mxu0 0.0
        %710 = vmatpush.msra.mxu0 0.0
        %711 = vmatpush.msra.mxu0 0.0
        %712 = vmatpush.msra.mxu0 0.0
        %713 = vmatpush.msra.mxu0 0.0
        %714 = vmatpush.msra.mxu0 0.0
        %715 = vmatpush.msra.mxu0 0.0
        %716 = vmatpush.msra.mxu0 0.0
        %717 = vmatpush.msra.mxu0 0.0
        %718 = vmatpush.msra.mxu0 %v698
        %719 = vmatpush.msra.mxu0 %v696
        %720 = vmatmul.f32.gmra.mxu0 %v702
        %v721 = vpop.f32.mrf.mxu0
        %v722 = vadd.f32 0.0, %v721
        %723 = vdwg.mxu0
        %v724 = vmul.f32 %v722, %v694
        %725 = vrot.lane.b32.xlu0 %v507, 104
        %v726 = vpop.permute.xlu0 %725
        %727 = vrot.lane.b32.xlu0 %v508, 104
        %v728 = vpop.permute.xlu0 %727
        %729 = vrot.lane.b32.xlu0 %v509, 104
        %v730 = vpop.permute.xlu0 %729
        %v731 = vsel %vm510, %v726, 0
        %v733 = vsel %vm510, %v728, 0
        %v735 = vsel %vm510, %v730, 0
        %737 = vmatpush.xpose.msra.mxu0 0.0
        %738 = vmatpush.xpose.msra.mxu0 0.0
        %739 = vmatpush.xpose.msra.mxu0 0.0
        %740 = vmatpush.xpose.msra.mxu0 0.0
        %741 = vmatpush.xpose.msra.mxu0 0.0
        %742 = vmatpush.xpose.msra.mxu0 0.0
        %743 = vmatpush.xpose.msra.mxu0 0.0
        %744 = vmatpush.xpose.msra.mxu0 0.0
        %745 = vmatpush.xpose.msra.mxu0 0.0
        %746 = vmatpush.xpose.msra.mxu0 0.0
        %747 = vmatpush.xpose.msra.mxu0 0.0
        %748 = vmatpush.xpose.msra.mxu0 0.0
        %749 = vmatpush.xpose.msra.mxu0 0.0
        %750 = vmatpush.xpose.msra.mxu0 0.0
        %751 = vmatpush.xpose.msra.mxu0 %v735
        %752 = vmatpush.xpose.msra.mxu0 %v733
        %753 = vmatmul.f32.gmra.mxu0 %v731
        %v754 = vpop.f32.mrf.mxu0
        %v755 = vadd.f32 0.0, %v754
        %756 = vdwg.mxu0
        %v757 = vsel %vm540, %v755, -inf
        %758 = vmax.xlane.f32.xlu0 %v757
        %v759 = vpop.xlane.xlu0 %758
        %v760 = vsub.f32 %v755, %v759
        %v761 = vmul.f32 %v760, 1.442695
        %v762 = vpow.pop %v761
        %v763 = vsel %vm540, %v762, 0.0
        %764 = vadd.xlane.f32.xlu0 %v763
        %v765 = vpop.xlane.xlu0 %764
        %v766 = vrcp.pop %v765
        %767 = vrot.lane.b32.xlu0 %v508, 72
        %v768 = vpop.permute.xlu0 %767
        %769 = vrot.lane.b32.xlu0 %v509, 72
        %v770 = vpop.permute.xlu0 %769
        %v774 = vsel %vm540, %v762, 0
        %776 = vmatpush.msra.mxu0 0.0
        %777 = vmatpush.msra.mxu0 0.0
        %778 = vmatpush.msra.mxu0 0.0
        %779 = vmatpush.msra.mxu0 0.0
        %780 = vmatpush.msra.mxu0 0.0
        %781 = vmatpush.msra.mxu0 0.0
        %782 = vmatpush.msra.mxu0 0.0
        %783 = vmatpush.msra.mxu0 0.0
        %784 = vmatpush.msra.mxu0 0.0
        %785 = vmatpush.msra.mxu0 0.0
        %786 = vmatpush.msra.mxu0 0.0
        %787 = vmatpush.msra.mxu0 0.0
        %788 = vmatpush.msra.mxu0 0.0
        %789 = vmatpush.msra.mxu0 0.0
        %790 = vmatpush.msra.mxu0 %v770
        %791 = vmatpush.msra.mxu0 %v768
        %792 = vmatmul.f32.gmra.mxu0 %v774
        %v793 = vpop.f32.mrf.mxu0
        %v794 = vadd.f32 0.0, %v793
        %795 = vdwg.mxu0
        %v796 = vmul.f32 %v794, %v766
        %798 = vrot.lane.b32.xlu0 %v652, 8
        %v799 = vpop.permute.xlu0 %798
        %802 = vrot.lane.b32.xlu0 %v724, 16
        %v803 = vpop.permute.xlu0 %802
        %806 = vrot.lane.b32.xlu0 %v796, 24
        %v807 = vpop.permute.xlu0 %806
        %v809 = vsel %vm510, %v580, %v799
        %v810 = vsel %vm540, %v809, %v803
        %vm811 = vcmask 195584
        %v812 = vsel %vm811, %v810, %v807
        %v813 = vld [vmem:[#allocation12] sm:$0xff]
        %v814 = vld [vmem:[#allocation12 + $0x8] sm:$0xff]
        %v815 = vld [vmem:[#allocation12 + $0x10] sm:$0xff]
        %v816 = vld [vmem:[#allocation12 + $0x18] sm:$0xff]
        %v817 = vld [vmem:[%s7] sm:$0x1]
        %v819 = vperm.slane %v817, 0
        %vm821 = vcmask 261120
        %v823 = vsel %vm821, %v812, 0
        %825 = vmatpush.msra.mxu0 0.0
        %826 = vmatpush.msra.mxu0 0.0
        %827 = vmatpush.msra.mxu0 0.0
        %828 = vmatpush.msra.mxu0 0.0
        %829 = vmatpush.msra.mxu0 0.0
        %830 = vmatpush.msra.mxu0 0.0
        %831 = vmatpush.msra.mxu0 0.0
        %832 = vmatpush.msra.mxu0 0.0
        %833 = vmatpush.msra.mxu0 0.0
        %834 = vmatpush.msra.mxu0 0.0
        %835 = vmatpush.msra.mxu0 0.0
        %836 = vmatpush.msra.mxu0 0.0
        %837 = vmatpush.msra.mxu0 %v816
        %838 = vmatpush.msra.mxu0 %v815
        %839 = vmatpush.msra.mxu0 %v814
        %840 = vmatpush.msra.mxu0 %v813
        %841 = vmatmul.f32.gmra.mxu0 %v823
        %v842 = vpop.f32.mrf.mxu0
        %v843 = vadd.f32 %v819, %v842
        %844 = vdwg.mxu0
        %845 = vst.msk [vmem:[%s424] sm:$0xff] %vm821, %v843
        %s846 = sand.u32 %s229, 1
        %s847 = scalar_lea.sflag [#allocation6], %s846
        %s848 = sand.u32 %s229, 1
        %s849 = smul.addr %s848, 8
        %s850 = scalar_lea.vmem [#allocation13], %s849
        // Predicated region
        $region77: #{tpu_custom_call.1} parent=51 // pred_check
          %p851 = pneg %p239
        $region78: #{tpu_custom_call.1} parent=51 // pred_check_branch
          %853 = sbr.rel (%p851) target = $region80
        $region79: #{tpu_custom_call.1} parent=51 // pred_region
          %855 = vsyncadd %s847, 0
          %s856 = sadd.s32 %s34, %s33
          %s857 = smul.addr %s856, 8
          %s858 = scalar_lea.hbm %s8, %s857
          %s860 = sshll.u32 %s850, 4
          %s861 = int_to_ptr.vmem [resolvable:$true] %s860
          %s862 = sshll.u32 %s858, 4
          %s863 = int_to_ptr.hbm [resolvable:$true] %s862
          %865 = dma.vmem_to_hbm [thread:$0]  %s861, 128, %s863, %s847
        $region80: #{tpu_custom_call.1} parent=51 // pred_fallthru
          _
      $region52: #{tpu_custom_call.1} parent=5 // pred_fallthru
        _
      %p866 = scmp.le.s32.totalorder 2, %s24
      // Predicated region
      $region81: #{tpu_custom_call.1} parent=5 // pred_check
        %p867 = pneg %p866
      $region82: #{tpu_custom_call.1} parent=5 // pred_check_branch
        %869 = sbr.rel (%p867) target = $region84
      $region83: #{tpu_custom_call.1} parent=5 // pred_region
        %s870 = ssub.s32 %s24, 2
        // Predicated region
        $region85: #{tpu_custom_call.1} parent=83 // pred_check
          %p871 = pneg %p245
        $region86: #{tpu_custom_call.1} parent=83 // pred_check_branch
          %873 = sbr.rel (%p871) target = $region88
        $region87: #{tpu_custom_call.1} parent=83 // pred_region
          %s874 = sand.u32 %s230, 1
          %s875 = scalar_lea.sflag [#allocation6], %s874
          %s876 = sand.u32 %s230, 1
          %s877 = smul.addr %s876, 8
          %s878 = scalar_lea.vmem [#allocation13], %s877
          %880 = dma.done %s875, 128
        $region88: #{tpu_custom_call.1} parent=83 // pred_fallthru
          _
      $region84: #{tpu_custom_call.1} parent=5 // pred_fallthru
        _
    $region6: #{tpu_custom_call.1} parent=1 // loop_footer
      %s28 = sadd.s32 1, %s24
    $region7: #{tpu_custom_call.1} parent=1 // loop_footer_branch
      %23 = sbr.rel target = $region3
    $region8: #{tpu_custom_call.1} parent=1 // loop_exit
      _
    %881 = vsyncpa [#allocation5], 1
    %s882 = scalar_lea.sflag [#allocation5], 1
    %883 = vsyncpa %s882, 1
    %884 = vsyncpa [#allocation8], 1
    %s885 = scalar_lea.sflag [#allocation8], 1
    %886 = vsyncpa %s885, 1
    %887 = vsyncpa [#allocation11], 1
    %888 = vsyncpa [#allocation6], 1
    %s889 = scalar_lea.sflag [#allocation6], 1
    %890 = vsyncpa %s889, 1

</llo_original>
